<compile_context>
chip_gen: v7x
topology: tpu7x:2x2x1
jax: 0.10.0
libtpu: 0.0.40
codegen_flags: <defaults>
</compile_context>

<pallas_src>
import functools

import jax
import jax.numpy as jnp
from jax import lax
from jax.experimental import pallas as pl
from jax.experimental.pallas import tpu as pltpu


def _torus_conv_gn_kernel(x_ref, w_ref, pair_ref, params_ref, meta_ref, out_ref, *,
                          kh, kw, H, W, use_gn, eps, cpg, need_valid):
    # x_ref:      (Bt, Cin_p, Lc)   flat H*W plane (lane-padded), NO circular pad
    # w_ref:      (Cout, kh*kw*Cin_p) fused weight matrix (tap-major, chan-minor)
    # pair_ref:   (Cout, Cout)      1.0 where two channels share a GN group
    # params_ref: (3, Cout, 1)      [conv bias, gn gamma, gn beta]
    # meta_ref:   (8, Lc)           rows: [valid, j-index, i-index, 0...]
    # out_ref:    (Bt, Cout, Lc)    lane-dense NC(HW) output
    Bt, _, Lc = x_ref.shape
    e0, e1 = kh // 2, kw // 2
    HW = H * W

    meta = meta_ref[...]                       # (8, Lc) f32
    valid = meta[0:1]                          # (1, Lc)
    jj = meta[1:2]                             # (1, Lc) column index
    ii = meta[2:3]                             # (1, Lc) row index

    w_big = w_ref[...]                         # (Cout, K)
    bias, gamma, beta = params_ref[0], params_ref[1], params_ref[2]   # (Cout, 1)
    pair = pair_ref[...]                       # (Cout, Cout)
    inv_n = 1.0 / float(cpg * HW)

    def shift(a, s):
        # out[:, q] = a[:, (q + s) mod Lc]   (XLU lane rotation)
        r = (-s) % Lc
        return a if r == 0 else pltpu.roll(a, r, axis=1)

    for bt in range(Bt):                       # small static unroll (folded batch)
        xb = x_ref[bt]                         # (Cin_p, Lc)

        # Column (width) shifts with mod-W wrap: select between two rolls.
        cols = {}
        for b in range(kw):
            dj = b - e1
            if dj == 0:
                cols[dj] = xb
            elif dj > 0:
                cols[dj] = jnp.where(jj >= float(W - dj),
                                     shift(xb, dj - W), shift(xb, dj))
            else:
                cols[dj] = jnp.where(jj < float(-dj),
                                     shift(xb, dj + W), shift(xb, dj))

        # Row (height) shifts with mod-H wrap, stacked tap-major along sublanes.
        taps = []
        for a in range(kh):
            di = a - e0
            for b in range(kw):
                c = cols[b - e1]
                if di == 0:
                    t = c
                elif di > 0:
                    t = jnp.where(ii >= float(H - di),
                                  shift(c, di * W - HW), shift(c, di * W))
                else:
                    t = jnp.where(ii < float(-di),
                                  shift(c, di * W + HW), shift(c, di * W))
                taps.append(t)
        stacked = jnp.concatenate(taps, axis=0)            # (kh*kw*Cin_p, Lc)

        # Single fused matmul over K = kh*kw*Cin_p, f32 accumulation on the MXU.
        y = jnp.dot(w_big, stacked, preferred_element_type=jnp.float32) + bias

        if use_gn:
            # Per-channel lane sums (XLU), then tiny group-mix matmul.
            ym = y * valid if need_valid else y
            s = jnp.sum(ym, axis=1, keepdims=True)                      # (Cout, 1)
            mean = jnp.dot(pair, s, preferred_element_type=jnp.float32) * inv_n
            cen = y - mean
            csq = cen * cen
            if need_valid:
                csq = csq * valid
            sq = jnp.sum(csq, axis=1, keepdims=True)                    # (Cout, 1)
            var = jnp.dot(pair, sq, preferred_element_type=jnp.float32) * inv_n
            y = cen * (lax.rsqrt(var + eps) * gamma) + beta

        out_ref[bt] = y.astype(out_ref.dtype)


def _pick_batch_tile(B, per_plane_bytes, budget_bytes=16 << 20):
    best = 1
    for bt in range(1, B + 1):
        if B % bt != 0:
            continue
        if B >= 2 and B // bt < 2:
            continue            # keep >= 2 grid steps so v7x's two TCs both get work
        if 2 * bt * per_plane_bytes > budget_bytes:   # double-buffered blocks
            continue
        best = max(best, bt)
    return best


def torus_conv2d(x, conv_w, conv_b, gn_w, gn_b, kernel_size, use_gn,
                 eps=1e-5, compute_dtype=jnp.float32):
    """x: (B, Cin, H, W) NCHW. Returns (B, Cout, H, W) float32."""
    kh, kw = kernel_size
    B, Cin, H, W = x.shape
    Cout = conv_w.shape[0]
    assert Cout % 2 == 0, "Out channel must be divisible by 2"
    HW = H * W
    Lc = ((HW + 127) // 128) * 128            # lane-dense flat plane length
    Cin_p = ((Cin + 7) // 8) * 8              # sublane-aligned input channels
    K = kh * kw * Cin_p

    # Flat, channel-/lane-padded input.  No circular padding in HBM — the torus
    # wrap is done with lane rolls inside the kernel.
    xf = x.astype(compute_dtype).reshape(B, Cin, HW)
    xf = jnp.pad(xf, ((0, 0), (0, Cin_p - Cin), (0, Lc - HW)))
    # TODO(synk): pass allow_input_fusion so this small zero-pad fuses into the
    # pallas_call instead of materializing in HBM.

    # Fused weight matrix: w_big[co, (a*kw+b)*Cin_p + ci] = conv_w[co, ci, a, b].
    wt = jnp.transpose(conv_w.astype(compute_dtype), (0, 2, 3, 1))  # (Cout,kh,kw,Cin)
    wt = jnp.pad(wt, ((0, 0), (0, 0), (0, 0), (0, Cin_p - Cin)))
    w_big = wt.reshape(Cout, K)

    # GroupNorm group-membership matrix (module: num_groups = Cout // 2).
    num_groups = Cout // 2
    cpg = Cout // num_groups
    group = jnp.arange(Cout) // cpg
    pair = (group[:, None] == group[None, :]).astype(jnp.float32)   # (Cout, Cout)

    params = jnp.stack([conv_b, gn_w, gn_b]).astype(jnp.float32).reshape(3, Cout, 1)

    # Lane metadata [valid, j, i], hoisted out of the kernel.
    q = jnp.arange(Lc, dtype=jnp.int32)
    valid = q < HW
    jj = jnp.where(valid, q % W, -1)
    ii = jnp.where(valid, q // W, -1)
    meta = jnp.stack([valid.astype(jnp.float32),
                      jj.astype(jnp.float32),
                      ii.astype(jnp.float32)], axis=0)
    meta = jnp.pad(meta, ((0, 8 - meta.shape[0]), (0, 0)))          # (8, Lc)

    in_itemsize = jnp.dtype(compute_dtype).itemsize
    per_plane_bytes = Cin_p * Lc * in_itemsize + Cout * Lc * 4
    Bt = _pick_batch_tile(B, per_plane_bytes)
    grid = (B // Bt,)

    kernel = functools.partial(
        _torus_conv_gn_kernel, kh=kh, kw=kw, H=H, W=W,
        use_gn=use_gn, eps=eps, cpg=cpg, need_valid=(Lc != HW))

    cost = pl.CostEstimate(
        flops=2 * B * Cout * K * Lc + (6 * B * Cout * Lc if use_gn else 0),
        transcendentals=B * Cout if use_gn else 0,
        bytes_accessed=(xf.size * in_itemsize + w_big.size * in_itemsize
                        + B * Cout * Lc * 4 + meta.size * 4
                        + pair.size * 4 + params.size * 4))

    out = pl.pallas_call(
        kernel,
        out_shape=jax.ShapeDtypeStruct((B, Cout, Lc), jnp.float32),
        grid_spec=pltpu.PrefetchScalarGridSpec(
            num_scalar_prefetch=0,
            grid=grid,
            in_specs=[
                pl.BlockSpec((Bt, Cin_p, Lc), lambda g: (g, 0, 0)),
                pl.BlockSpec((Cout, K), lambda g: (0, 0)),
                pl.BlockSpec((Cout, Cout), lambda g: (0, 0)),
                pl.BlockSpec((3, Cout, 1), lambda g: (0, 0, 0)),
                pl.BlockSpec((8, Lc), lambda g: (0, 0)),
            ],
            out_specs=pl.BlockSpec((Bt, Cout, Lc), lambda g: (g, 0, 0)),
        ),
        compiler_params=pltpu.CompilerParams(
            dimension_semantics=("parallel",)),
        cost_estimate=cost,
    )(xf, w_big, pair, params, meta)

    # Free reshape when H*W is a multiple of 128 (contiguous slice otherwise).
    return out[:, :, :HW].reshape(B, Cout, H, W)


def _reference(x, conv_w, conv_b, gn_w, gn_b, kernel_size, use_gn):
    kh, kw = kernel_size
    e0, e1 = kh // 2, kw // 2
    B, Cin, H, W = x.shape
    Cout = conv_w.shape[0]
    h = jnp.concatenate([x[:, :, :, W - e1:], x, x[:, :, :, :e1]], axis=3)
    h = jnp.concatenate([h[:, :, H - e0:], h, h[:, :, :e0]], axis=2)
    y = lax.conv_general_dilated(
        h, conv_w, window_strides=(1, 1), padding="VALID",
        dimension_numbers=("NCHW", "OIHW", "NCHW"))
    y = y + conv_b[None, :, None, None]
    if use_gn:
        G = Cout // 2
        yg = y.reshape(B, G, 2, H, W)
        mean = jnp.mean(yg, axis=(2, 3, 4), keepdims=True)
        var = jnp.mean((yg - mean) ** 2, axis=(2, 3, 4), keepdims=True)
        yg = (yg - mean) * lax.rsqrt(var + 1e-5)
        y = yg.reshape(B, Cout, H, W)
        y = y * gn_w[None, :, None, None] + gn_b[None, :, None, None]
    return y


if __name__ == "__main__":
    # Small shapes consistent with the module: NCHW input, 3x3 torus conv.
    B, Cin, H, W = 2, 4, 16, 16
    Cout = 8                        # divisible by 2 (GroupNorm groups = 4)
    kernel_size = (3, 3)
    use_gn = True

    key = jax.random.PRNGKey(0)
    k1, k2, k3, k4, k5 = jax.random.split(key, 5)
    x = jax.random.normal(k1, (B, Cin, H, W), dtype=jnp.float32)
    conv_w = jax.random.normal(k2, (Cout, Cin, *kernel_size), dtype=jnp.float32) * 0.1
    conv_b = jax.random.normal(k3, (Cout,), dtype=jnp.float32) * 0.1
    gn_w = 1.0 + 0.1 * jax.random.normal(k4, (Cout,), dtype=jnp.float32)
    gn_b = 0.1 * jax.random.normal(k5, (Cout,), dtype=jnp.float32)

    ref = _reference(x, conv_w, conv_b, gn_w, gn_b, kernel_size, use_gn)

    # f32 path (matches the PyTorch module's precision).
    out = torus_conv2d(x, conv_w, conv_b, gn_w, gn_b, kernel_size, use_gn,
                       compute_dtype=jnp.float32)
    out = jax.block_until_ready(out)
    if not jnp.allclose(out, ref, atol=1e-4, rtol=1e-4):
        err = float(jnp.max(jnp.abs(out - ref)))
        raise AssertionError(
            f"Pallas TorusConv2d (f32) mismatch vs reference (max abs err {err:.3e})")

    # bf16 matmul inputs, f32 accumulate + GN math (v6e/v7x fast path).
    out_bf = torus_conv2d(x, conv_w, conv_b, gn_w, gn_b, kernel_size, use_gn,
                          compute_dtype=jnp.bfloat16)
    out_bf = jax.block_until_ready(out_bf)
    if not jnp.allclose(out_bf, ref, atol=1e-1, rtol=1e-1):
        err = float(jnp.max(jnp.abs(out_bf - ref)))
        raise AssertionError(
            f"Pallas TorusConv2d (bf16) mismatch vs reference (max abs err {err:.3e})")

    print("KERNEL_OK")
</pallas_src>

<mosaic_0001>
module attributes {stable_mosaic.version = 11 : i64} {
  func.func @_torus_conv_gn_kernel(%arg0: i32, %arg1: memref<1x8x256xf32, #tpu.memory_space<vmem>>, %arg2: memref<8x72xf32, #tpu.memory_space<vmem>>, %arg3: memref<8x8xf32, #tpu.memory_space<vmem>>, %arg4: memref<3x8x1xf32, #tpu.memory_space<vmem>>, %arg5: memref<8x256xf32, #tpu.memory_space<vmem>>, %arg6: memref<1x8x256xf32, #tpu.memory_space<vmem>>) attributes {dimension_semantics = [#tpu.dimension_semantics<parallel>], iteration_bounds = array<i64: 2>, scalar_prefetch = 0 : i64, scratch_operands = 0 : i64, tpu.core_type = #tpu.core_type<tc>, window_params = [{transform_indices = @transform_0, window_bounds = array<i64: 1, 8, 256>}, {pipeline_mode = #tpu.pipeline_mode<synchronous>, transform_indices = @transform_1, window_bounds = array<i64: 8, 72>}, {pipeline_mode = #tpu.pipeline_mode<synchronous>, transform_indices = @transform_2, window_bounds = array<i64: 8, 8>}, {pipeline_mode = #tpu.pipeline_mode<synchronous>, transform_indices = @transform_3, window_bounds = array<i64: 3, 8, 1>}, {pipeline_mode = #tpu.pipeline_mode<synchronous>, transform_indices = @transform_4, window_bounds = array<i64: 8, 256>}, {transform_indices = @transform_5, window_bounds = array<i64: 1, 8, 256>}]} {
    %c0 = arith.constant 0 : index
    %c0_0 = arith.constant 0 : index
    %0 = vector.load %arg5[%c0, %c0_0] : memref<8x256xf32, #tpu.memory_space<vmem>>, vector<8x256xf32>
    %1 = vector.extract_strided_slice %0 {offsets = [1, 0], sizes = [1, 256], strides = [1, 1]} : vector<8x256xf32> to vector<1x256xf32>
    %2 = vector.extract_strided_slice %0 {offsets = [2, 0], sizes = [1, 256], strides = [1, 1]} : vector<8x256xf32> to vector<1x256xf32>
    %c0_1 = arith.constant 0 : index
    %c0_2 = arith.constant 0 : index
    %3 = vector.load %arg2[%c0_1, %c0_2] : memref<8x72xf32, #tpu.memory_space<vmem>>, vector<8x72xf32>
    %c0_3 = arith.constant 0 : index
    %c0_4 = arith.constant 0 : index
    %c0_5 = arith.constant 0 : index
    %4 = vector.load %arg4[%c0_3, %c0_4, %c0_5] : memref<3x8x1xf32, #tpu.memory_space<vmem>>, vector<1x8x1xf32>
    %5 = vector.shape_cast %4 : vector<1x8x1xf32> to vector<8x1xf32>
    %c1 = arith.constant 1 : index
    %c0_6 = arith.constant 0 : index
    %c0_7 = arith.constant 0 : index
    %6 = vector.load %arg4[%c1, %c0_6, %c0_7] : memref<3x8x1xf32, #tpu.memory_space<vmem>>, vector<1x8x1xf32>
    %7 = vector.shape_cast %6 : vector<1x8x1xf32> to vector<8x1xf32>
    %c2 = arith.constant 2 : index
    %c0_8 = arith.constant 0 : index
    %c0_9 = arith.constant 0 : index
    %8 = vector.load %arg4[%c2, %c0_8, %c0_9] : memref<3x8x1xf32, #tpu.memory_space<vmem>>, vector<1x8x1xf32>
    %9 = vector.shape_cast %8 : vector<1x8x1xf32> to vector<8x1xf32>
    %c0_10 = arith.constant 0 : index
    %c0_11 = arith.constant 0 : index
    %10 = vector.load %arg3[%c0_10, %c0_11] : memref<8x8xf32, #tpu.memory_space<vmem>>, vector<8x8xf32>
    %c0_12 = arith.constant 0 : index
    %c0_13 = arith.constant 0 : index
    %c0_14 = arith.constant 0 : index
    %11 = vector.load %arg1[%c0_12, %c0_13, %c0_14] : memref<1x8x256xf32, #tpu.memory_space<vmem>>, vector<1x8x256xf32>
    %12 = vector.shape_cast %11 : vector<1x8x256xf32> to vector<8x256xf32>
    %cst = arith.constant 1.000000e+00 : f32
    %13 = vector.broadcast %cst : f32 to vector<1x256xf32>
    %14 = arith.cmpf olt, %1, %13 : vector<1x256xf32>
    %c241_i32 = arith.constant 241 : i32
    %15 = tpu.dynamic_rotate %12 by %c241_i32 dim 1 : vector<8x256xf32>, i32 -> vector<8x256xf32>
    %c1_i32 = arith.constant 1 : i32
    %16 = tpu.dynamic_rotate %12 by %c1_i32 dim 1 : vector<8x256xf32>, i32 -> vector<8x256xf32>
    %17 = vector.shape_cast %14 : vector<1x256xi1> to vector<1x256xi1>
    %18 = vector.broadcast %17 : vector<1x256xi1> to vector<8x256xi1>
    %19 = arith.select %18, %15, %16 : vector<8x256xi1>, vector<8x256xf32>
    %cst_15 = arith.constant 1.500000e+01 : f32
    %20 = vector.broadcast %cst_15 : f32 to vector<1x256xf32>
    %21 = arith.cmpf oge, %1, %20 : vector<1x256xf32>
    %c15_i32 = arith.constant 15 : i32
    %22 = tpu.dynamic_rotate %12 by %c15_i32 dim 1 : vector<8x256xf32>, i32 -> vector<8x256xf32>
    %c255_i32 = arith.constant 255 : i32
    %23 = tpu.dynamic_rotate %12 by %c255_i32 dim 1 : vector<8x256xf32>, i32 -> vector<8x256xf32>
    %24 = vector.shape_cast %21 : vector<1x256xi1> to vector<1x256xi1>
    %25 = vector.broadcast %24 : vector<1x256xi1> to vector<8x256xi1>
    %26 = arith.select %25, %22, %23 : vector<8x256xi1>, vector<8x256xf32>
    %cst_16 = arith.constant 1.000000e+00 : f32
    %27 = vector.broadcast %cst_16 : f32 to vector<1x256xf32>
    %28 = arith.cmpf olt, %2, %27 : vector<1x256xf32>
    %c16_i32 = arith.constant 16 : i32
    %29 = tpu.dynamic_rotate %19 by %c16_i32 dim 1 : vector<8x256xf32>, i32 -> vector<8x256xf32>
    %c16_i32_17 = arith.constant 16 : i32
    %30 = tpu.dynamic_rotate %19 by %c16_i32_17 dim 1 : vector<8x256xf32>, i32 -> vector<8x256xf32>
    %31 = vector.shape_cast %28 : vector<1x256xi1> to vector<1x256xi1>
    %32 = vector.broadcast %31 : vector<1x256xi1> to vector<8x256xi1>
    %33 = arith.select %32, %29, %30 : vector<8x256xi1>, vector<8x256xf32>
    %cst_18 = arith.constant 1.000000e+00 : f32
    %34 = vector.broadcast %cst_18 : f32 to vector<1x256xf32>
    %35 = arith.cmpf olt, %2, %34 : vector<1x256xf32>
    %c16_i32_19 = arith.constant 16 : i32
    %36 = tpu.dynamic_rotate %12 by %c16_i32_19 dim 1 : vector<8x256xf32>, i32 -> vector<8x256xf32>
    %c16_i32_20 = arith.constant 16 : i32
    %37 = tpu.dynamic_rotate %12 by %c16_i32_20 dim 1 : vector<8x256xf32>, i32 -> vector<8x256xf32>
    %38 = vector.shape_cast %35 : vector<1x256xi1> to vector<1x256xi1>
    %39 = vector.broadcast %38 : vector<1x256xi1> to vector<8x256xi1>
    %40 = arith.select %39, %36, %37 : vector<8x256xi1>, vector<8x256xf32>
    %cst_21 = arith.constant 1.000000e+00 : f32
    %41 = vector.broadcast %cst_21 : f32 to vector<1x256xf32>
    %42 = arith.cmpf olt, %2, %41 : vector<1x256xf32>
    %c16_i32_22 = arith.constant 16 : i32
    %43 = tpu.dynamic_rotate %26 by %c16_i32_22 dim 1 : vector<8x256xf32>, i32 -> vector<8x256xf32>
    %c16_i32_23 = arith.constant 16 : i32
    %44 = tpu.dynamic_rotate %26 by %c16_i32_23 dim 1 : vector<8x256xf32>, i32 -> vector<8x256xf32>
    %45 = vector.shape_cast %42 : vector<1x256xi1> to vector<1x256xi1>
    %46 = vector.broadcast %45 : vector<1x256xi1> to vector<8x256xi1>
    %47 = arith.select %46, %43, %44 : vector<8x256xi1>, vector<8x256xf32>
    %cst_24 = arith.constant 1.500000e+01 : f32
    %48 = vector.broadcast %cst_24 : f32 to vector<1x256xf32>
    %49 = arith.cmpf oge, %2, %48 : vector<1x256xf32>
    %c240_i32 = arith.constant 240 : i32
    %50 = tpu.dynamic_rotate %19 by %c240_i32 dim 1 : vector<8x256xf32>, i32 -> vector<8x256xf32>
    %c240_i32_25 = arith.constant 240 : i32
    %51 = tpu.dynamic_rotate %19 by %c240_i32_25 dim 1 : vector<8x256xf32>, i32 -> vector<8x256xf32>
    %52 = vector.shape_cast %49 : vector<1x256xi1> to vector<1x256xi1>
    %53 = vector.broadcast %52 : vector<1x256xi1> to vector<8x256xi1>
    %54 = arith.select %53, %50, %51 : vector<8x256xi1>, vector<8x256xf32>
    %cst_26 = arith.constant 1.500000e+01 : f32
    %55 = vector.broadcast %cst_26 : f32 to vector<1x256xf32>
    %56 = arith.cmpf oge, %2, %55 : vector<1x256xf32>
    %c240_i32_27 = arith.constant 240 : i32
    %57 = tpu.dynamic_rotate %12 by %c240_i32_27 dim 1 : vector<8x256xf32>, i32 -> vector<8x256xf32>
    %c240_i32_28 = arith.constant 240 : i32
    %58 = tpu.dynamic_rotate %12 by %c240_i32_28 dim 1 : vector<8x256xf32>, i32 -> vector<8x256xf32>
    %59 = vector.shape_cast %56 : vector<1x256xi1> to vector<1x256xi1>
    %60 = vector.broadcast %59 : vector<1x256xi1> to vector<8x256xi1>
    %61 = arith.select %60, %57, %58 : vector<8x256xi1>, vector<8x256xf32>
    %cst_29 = arith.constant 1.500000e+01 : f32
    %62 = vector.broadcast %cst_29 : f32 to vector<1x256xf32>
    %63 = arith.cmpf oge, %2, %62 : vector<1x256xf32>
    %c240_i32_30 = arith.constant 240 : i32
    %64 = tpu.dynamic_rotate %26 by %c240_i32_30 dim 1 : vector<8x256xf32>, i32 -> vector<8x256xf32>
    %c240_i32_31 = arith.constant 240 : i32
    %65 = tpu.dynamic_rotate %26 by %c240_i32_31 dim 1 : vector<8x256xf32>, i32 -> vector<8x256xf32>
    %66 = vector.shape_cast %63 : vector<1x256xi1> to vector<1x256xi1>
    %67 = vector.broadcast %66 : vector<1x256xi1> to vector<8x256xi1>
    %68 = arith.select %67, %64, %65 : vector<8x256xi1>, vector<8x256xf32>
    %69 = tpu.concatenate %33, %40, %47, %19, %12, %26, %54, %61, %68 in 0 : vector<8x256xf32>, vector<8x256xf32>, vector<8x256xf32>, vector<8x256xf32>, vector<8x256xf32>, vector<8x256xf32>, vector<8x256xf32>, vector<8x256xf32>, vector<8x256xf32> -> vector<72x256xf32>
    %cst_32 = arith.constant dense<0.000000e+00> : vector<8x256xf32>
    %70 = tpu.matmul %3, %69, %cst_32 {dimension_numbers = #tpu.dot_dimension_numbers<[1], [0], [0], [1], [0, 0, 1, 1], [], []>} : vector<8x72xf32>, vector<72x256xf32>, vector<8x256xf32> -> vector<8x256xf32>
    %71 = vector.broadcast %5 : vector<8x1xf32> to vector<8x256xf32>
    %72 = arith.addf %70, %71 : vector<8x256xf32>
    %cst_33 = arith.constant dense<0.000000e+00> : vector<8xf32>
    %73 = vector.multi_reduction <add>, %72, %cst_33 [1] : vector<8x256xf32> to vector<8xf32>
    %74 = vector.shape_cast %73 : vector<8xf32> to vector<8x1xf32>
    %cst_34 = arith.constant dense<0.000000e+00> : vector<8x1xf32>
    %75 = tpu.matmul %10, %74, %cst_34 {dimension_numbers = #tpu.dot_dimension_numbers<[1], [0], [0], [1], [0, 0, 1, 1], [], []>} : vector<8x8xf32>, vector<8x1xf32>, vector<8x1xf32> -> vector<8x1xf32>
    %cst_35 = arith.constant 0.001953125 : f32
    %76 = vector.broadcast %cst_35 : f32 to vector<8x1xf32>
    %77 = arith.mulf %75, %76 : vector<8x1xf32>
    %78 = vector.broadcast %77 : vector<8x1xf32> to vector<8x256xf32>
    %79 = arith.subf %72, %78 : vector<8x256xf32>
    %80 = arith.mulf %79, %79 : vector<8x256xf32>
    %cst_36 = arith.constant dense<0.000000e+00> : vector<8xf32>
    %81 = vector.multi_reduction <add>, %80, %cst_36 [1] : vector<8x256xf32> to vector<8xf32>
    %82 = vector.shape_cast %81 : vector<8xf32> to vector<8x1xf32>
    %cst_37 = arith.constant dense<0.000000e+00> : vector<8x1xf32>
    %83 = tpu.matmul %10, %82, %cst_37 {dimension_numbers = #tpu.dot_dimension_numbers<[1], [0], [0], [1], [0, 0, 1, 1], [], []>} : vector<8x8xf32>, vector<8x1xf32>, vector<8x1xf32> -> vector<8x1xf32>
    %cst_38 = arith.constant 0.001953125 : f32
    %84 = vector.broadcast %cst_38 : f32 to vector<8x1xf32>
    %85 = arith.mulf %83, %84 : vector<8x1xf32>
    %cst_39 = arith.constant 9.99999974E-6 : f32
    %86 = vector.broadcast %cst_39 : f32 to vector<8x1xf32>
    %87 = arith.addf %85, %86 : vector<8x1xf32>
    %88 = math.rsqrt %87 : vector<8x1xf32>
    %89 = arith.mulf %88, %7 : vector<8x1xf32>
    %90 = vector.broadcast %89 : vector<8x1xf32> to vector<8x256xf32>
    %91 = arith.mulf %79, %90 : vector<8x256xf32>
    %92 = vector.broadcast %9 : vector<8x1xf32> to vector<8x256xf32>
    %93 = arith.addf %91, %92 : vector<8x256xf32>
    %c0_40 = arith.constant 0 : index
    %c0_41 = arith.constant 0 : index
    %c0_42 = arith.constant 0 : index
    %94 = vector.load %arg6[%c0_40, %c0_41, %c0_42] : memref<1x8x256xf32, #tpu.memory_space<vmem>>, vector<1x8x256xf32>
    %95 = vector.shape_cast %94 : vector<1x8x256xf32> to vector<8x256xf32>
    %96 = vector.shape_cast %93 : vector<8x256xf32> to vector<1x8x256xf32>
    tpu.vector_store %arg6[%c0_40, %c0_41, %c0_42], %96 {strides = array<i32>} : memref<1x8x256xf32, #tpu.memory_space<vmem>>, vector<1x8x256xf32>,
    return
  }
  func.func @transform_0(%arg0: i32) -> (i32, i32, i32) {
    %c0_i32 = arith.constant 0 : i32
    %c0_i32_0 = arith.constant 0 : i32
    %c0_i32_1 = arith.constant 0 : i32
    return %arg0, %c0_i32, %c0_i32_0 : i32, i32, i32
  }
  func.func @transform_1(%arg0: i32) -> (i32, i32) {
    %c0_i32 = arith.constant 0 : i32
    %c0_i32_0 = arith.constant 0 : i32
    %c0_i32_1 = arith.constant 0 : i32
    return %c0_i32, %c0_i32_0 : i32, i32
  }
  func.func @transform_2(%arg0: i32) -> (i32, i32) {
    %c0_i32 = arith.constant 0 : i32
    %c0_i32_0 = arith.constant 0 : i32
    %c0_i32_1 = arith.constant 0 : i32
    return %c0_i32, %c0_i32_0 : i32, i32
  }
  func.func @transform_3(%arg0: i32) -> (i32, i32, i32) {
    %c0_i32 = arith.constant 0 : i32
    %c0_i32_0 = arith.constant 0 : i32
    %c0_i32_1 = arith.constant 0 : i32
    %c0_i32_2 = arith.constant 0 : i32
    return %c0_i32, %c0_i32_0, %c0_i32_1 : i32, i32, i32
  }
  func.func @transform_4(%arg0: i32) -> (i32, i32) {
    %c0_i32 = arith.constant 0 : i32
    %c0_i32_0 = arith.constant 0 : i32
    %c0_i32_1 = arith.constant 0 : i32
    return %c0_i32, %c0_i32_0 : i32, i32
  }
  func.func @transform_5(%arg0: i32) -> (i32, i32, i32) {
    %c0_i32 = arith.constant 0 : i32
    %c0_i32_0 = arith.constant 0 : i32
    %c0_i32_1 = arith.constant 0 : i32
    return %arg0, %c0_i32, %c0_i32_0 : i32, i32, i32
  }
}

</mosaic_0001>

<llo_original>
// kernel: tpu_custom_call.1
$region0: #{tpu_custom_call.1}
  #allocation0 [shape = 'u32[]', space=smem, size = 0x4, offset = 0x4, fixed_abs, tag = 'smem constant byte address 0x4 - core index']
  #allocation1 [shape = 'u32[144,128]{1,0:T(1,128)}', space=vmem, size = 0x12000, scoped, tag = 'internal scratch']
  %s0 = inlined_call_operand.hbm [shape: f32[2,8,256], index: 0, kind: input, shape index: {}]
  %s1 = inlined_call_operand.vmem [shape: f32[8,72], index: 1, kind: input, shape index: {}]
  %s2 = inlined_call_operand.vmem [shape: f32[8,8], index: 2, kind: input, shape index: {}]
  %s3 = inlined_call_operand.vmem [shape: f32[3,8,1], index: 3, kind: input, shape index: {}]
  %s4 = inlined_call_operand.vmem [shape: f32[8,256], index: 4, kind: input, shape index: {}]
  %s5 = inlined_call_operand.hbm [shape: f32[2,8,256], index: 5, kind: output, shape index: {}]
  %s6 = sld [smem:[#allocation0]]
  $region57: #{tpu_custom_call.1} parent=0
    _
  %s8 = ssub.s32 1, %s6
  %s9 = scalar_select 0, %s8, %s6
  $region1: #{tpu_custom_call.1} parent=0
    #allocation2 [shape = 'u8[16384]{0}', space=vmem, size = 0x4000, scoped, tag = 'input window, operand 0']
    #allocation3 [shape = 's32[2]{0}', space=sflag, size = 0x8, scoped, tag = 'scoped memory for tpu_custom_call.1']
    #allocation4 [shape = 's32[2]{0}', space=sflag, size = 0x8, scoped, tag = 'scoped memory for tpu_custom_call.1']
    #allocation5 [shape = 'u8[16384]{0}', space=vmem, size = 0x4000, scoped, tag = 'output window, operand 0']
    %10 = vsyncpa [#allocation3], 0
    %s11 = scalar_lea.sflag [#allocation3], 1
    %12 = vsyncpa %s11, 0
    %13 = vsyncpa [#allocation4], 0
    %s14 = scalar_lea.sflag [#allocation4], 1
    %15 = vsyncpa %s14, 0
    loop: start=0, step=1, limit=4
    $region2: #{tpu_custom_call.1} parent=1 // loop_pre_header
      _
    $region3: #{tpu_custom_call.1} parent=1 // loop_header
      %s17 = sphi 0, %s21
      %p18 = scmp.ge.s32.totalorder %s17, 4
      %s27 = sphi 0, %s29
      %s30 = sphi 0, %s27
      %s31 = sphi 0, %s30
      %s47 = sphi 0, %s31
      %s51 = sphi 0, %s51
      %s53 = sphi 0, %s51
      %s54 = sphi 0, %s53
      %s68 = sphi 0, %s54
      %s72 = sphi 0, %s72
      %s74 = sphi 0, %s72
      %s75 = sphi 0, %s74
      %s89 = sphi 0, %s75
      %s93 = sphi 0, %s93
      %s95 = sphi 0, %s93
      %s96 = sphi 0, %s95
      %s110 = sphi 0, %s96
      %s114 = sphi 0, %s114
      %s116 = sphi 0, %s114
      %s117 = sphi 0, %s116
      %s131 = sphi 0, %s117
      %s137 = sphi 0, %s139
      %s140 = sphi 0, %s137
      %s141 = sphi 0, %s140
      %s157 = sphi 0, %s141
    $region4: #{tpu_custom_call.1} parent=1 // loop_header_branch
      %20 = sbr.rel (%p18) target = $region8
    $region5: #{tpu_custom_call.1} parent=1 // loop_body
      %s22 = ssub.s32 %s17, 1
      %s23 = ssub.s32 %s17, 2
      %s24 = sadd.s32 %s17, 1
      %s25 = ssub.s32 %s17, %s24
      %p26 = scmp.eq.s32.totalorder %s25, 0
      %s28 = sadd.s32 %s27, 1
      %s29 = scalar_select %p26, %s27, %s28
      %p32 = pneg %p26
      %p33 = scmp.eq.s32.totalorder %s17, 1
      %p34 = por %p32, %p33
      %p35 = scmp.ne.s32.totalorder %s27, %s30
      %p36 = scmp.eq.s32.totalorder %s17, 0
      %p37 = por %p35, %p36
      %p38 = scmp.ne.s32.totalorder %s27, %s30
      %p39 = scmp.eq.s32.totalorder %s22, 1
      %p40 = por %p38, %p39
      %p41 = scmp.ne.s32.totalorder %s30, %s31
      %p42 = scmp.eq.s32.totalorder %s22, 0
      %p43 = por %p41, %p42
      %p44 = scmp.ne.s32.totalorder %s30, %s31
      %p45 = scmp.eq.s32.totalorder %s23, 1
      %p46 = por %p44, %p45
      %p48 = scmp.ne.s32.totalorder %s31, %s47
      %p49 = scmp.eq.s32.totalorder %s23, 0
      %p50 = por %p48, %p49
      %s52 = sadd.s32 %s51, 1
      %p55 = scmp.eq.s32.totalorder %s17, 1
      %p56 = scmp.ne.s32.totalorder %s51, %s53
      %p57 = scmp.eq.s32.totalorder %s17, 0
      %p58 = por %p56, %p57
      %p59 = scmp.ne.s32.totalorder %s51, %s53
      %p60 = scmp.eq.s32.totalorder %s22, 1
      %p61 = por %p59, %p60
      %p62 = scmp.ne.s32.totalorder %s53, %s54
      %p63 = scmp.eq.s32.totalorder %s22, 0
      %p64 = por %p62, %p63
      %p65 = scmp.ne.s32.totalorder %s53, %s54
      %p66 = scmp.eq.s32.totalorder %s23, 1
      %p67 = por %p65, %p66
      %p69 = scmp.ne.s32.totalorder %s54, %s68
      %p70 = scmp.eq.s32.totalorder %s23, 0
      %p71 = por %p69, %p70
      %s73 = sadd.s32 %s72, 1
      %p76 = scmp.eq.s32.totalorder %s17, 1
      %p77 = scmp.ne.s32.totalorder %s72, %s74
      %p78 = scmp.eq.s32.totalorder %s17, 0
      %p79 = por %p77, %p78
      %p80 = scmp.ne.s32.totalorder %s72, %s74
      %p81 = scmp.eq.s32.totalorder %s22, 1
      %p82 = por %p80, %p81
      %p83 = scmp.ne.s32.totalorder %s74, %s75
      %p84 = scmp.eq.s32.totalorder %s22, 0
      %p85 = por %p83, %p84
      %p86 = scmp.ne.s32.totalorder %s74, %s75
      %p87 = scmp.eq.s32.totalorder %s23, 1
      %p88 = por %p86, %p87
      %p90 = scmp.ne.s32.totalorder %s75, %s89
      %p91 = scmp.eq.s32.totalorder %s23, 0
      %p92 = por %p90, %p91
      %s94 = sadd.s32 %s93, 1
      %p97 = scmp.eq.s32.totalorder %s17, 1
      %p98 = scmp.ne.s32.totalorder %s93, %s95
      %p99 = scmp.eq.s32.totalorder %s17, 0
      %p100 = por %p98, %p99
      %p101 = scmp.ne.s32.totalorder %s93, %s95
      %p102 = scmp.eq.s32.totalorder %s22, 1
      %p103 = por %p101, %p102
      %p104 = scmp.ne.s32.totalorder %s95, %s96
      %p105 = scmp.eq.s32.totalorder %s22, 0
      %p106 = por %p104, %p105
      %p107 = scmp.ne.s32.totalorder %s95, %s96
      %p108 = scmp.eq.s32.totalorder %s23, 1
      %p109 = por %p107, %p108
      %p111 = scmp.ne.s32.totalorder %s96, %s110
      %p112 = scmp.eq.s32.totalorder %s23, 0
      %p113 = por %p111, %p112
      %s115 = sadd.s32 %s114, 1
      %p118 = scmp.eq.s32.totalorder %s17, 1
      %p119 = scmp.ne.s32.totalorder %s114, %s116
      %p120 = scmp.eq.s32.totalorder %s17, 0
      %p121 = por %p119, %p120
      %p122 = scmp.ne.s32.totalorder %s114, %s116
      %p123 = scmp.eq.s32.totalorder %s22, 1
      %p124 = por %p122, %p123
      %p125 = scmp.ne.s32.totalorder %s116, %s117
      %p126 = scmp.eq.s32.totalorder %s22, 0
      %p127 = por %p125, %p126
      %p128 = scmp.ne.s32.totalorder %s116, %s117
      %p129 = scmp.eq.s32.totalorder %s23, 1
      %p130 = por %p128, %p129
      %p132 = scmp.ne.s32.totalorder %s117, %s131
      %p133 = scmp.eq.s32.totalorder %s23, 0
      %p134 = por %p132, %p133
      %s135 = ssub.s32 %s17, %s24
      %p136 = scmp.eq.s32.totalorder %s135, 0
      %s138 = sadd.s32 %s137, 1
      %s139 = scalar_select %p136, %s137, %s138
      %p142 = pneg %p136
      %p143 = scmp.eq.s32.totalorder %s17, 1
      %p144 = por %p142, %p143
      %p145 = scmp.ne.s32.totalorder %s137, %s140
      %p146 = scmp.eq.s32.totalorder %s17, 0
      %p147 = por %p145, %p146
      %p148 = scmp.ne.s32.totalorder %s137, %s140
      %p149 = scmp.eq.s32.totalorder %s22, 1
      %p150 = por %p148, %p149
      %p151 = scmp.ne.s32.totalorder %s140, %s141
      %p152 = scmp.eq.s32.totalorder %s22, 0
      %p153 = por %p151, %p152
      %p154 = scmp.ne.s32.totalorder %s140, %s141
      %p155 = scmp.eq.s32.totalorder %s23, 1
      %p156 = por %p154, %p155
      %p158 = scmp.ne.s32.totalorder %s141, %s157
      %p159 = scmp.eq.s32.totalorder %s23, 0
      %p160 = por %p158, %p159
      %p161 = scmp.le.s32.totalorder 1, %s17
      %p162 = scmp.lt.s32.totalorder %s17, 3
      %p163 = pnand %p161, %p162
      %p164 = pneg %p163
      // Predicated region
      $region9: #{tpu_custom_call.1} parent=5 // pred_check
        _
      $region10: #{tpu_custom_call.1} parent=5 // pred_check_branch
        %166 = sbr.rel (%p163) target = $region12
      $region11: #{tpu_custom_call.1} parent=5 // pred_region
        %s167 = ssub.s32 %s17, 1
        // Predicated region
        $region13: #{tpu_custom_call.1} parent=11 // pred_check
          %p168 = pneg %p64
        $region14: #{tpu_custom_call.1} parent=11 // pred_check_branch
          %170 = sbr.rel (%p168) target = $region16
        $region15: #{tpu_custom_call.1} parent=11 // pred_region
          _
        $region16: #{tpu_custom_call.1} parent=11 // pred_fallthru
          _
        // Predicated region
        $region17: #{tpu_custom_call.1} parent=11 // pred_check
          %p171 = pneg %p85
        $region18: #{tpu_custom_call.1} parent=11 // pred_check_branch
          %173 = sbr.rel (%p171) target = $region20
        $region19: #{tpu_custom_call.1} parent=11 // pred_region
          _
        $region20: #{tpu_custom_call.1} parent=11 // pred_fallthru
          _
        // Predicated region
        $region21: #{tpu_custom_call.1} parent=11 // pred_check
          %p174 = pneg %p106
        $region22: #{tpu_custom_call.1} parent=11 // pred_check_branch
          %176 = sbr.rel (%p174) target = $region24
        $region23: #{tpu_custom_call.1} parent=11 // pred_region
          _
        $region24: #{tpu_custom_call.1} parent=11 // pred_fallthru
          _
        // Predicated region
        $region25: #{tpu_custom_call.1} parent=11 // pred_check
          %p177 = pneg %p127
        $region26: #{tpu_custom_call.1} parent=11 // pred_check_branch
          %179 = sbr.rel (%p177) target = $region28
        $region27: #{tpu_custom_call.1} parent=11 // pred_region
          _
        $region28: #{tpu_custom_call.1} parent=11 // pred_fallthru
          _
      $region12: #{tpu_custom_call.1} parent=5 // pred_fallthru
        _
      %p180 = scmp.lt.s32.totalorder %s17, 2
      // Predicated region
      $region29: #{tpu_custom_call.1} parent=5 // pred_check
        %p181 = pneg %p180
      $region30: #{tpu_custom_call.1} parent=5 // pred_check_branch
        %183 = sbr.rel (%p181) target = $region32
      $region31: #{tpu_custom_call.1} parent=5 // pred_region
        // Predicated region
        $region33: #{tpu_custom_call.1} parent=31 // pred_check
          %p184 = pneg %p37
        $region34: #{tpu_custom_call.1} parent=31 // pred_check_branch
          %186 = sbr.rel (%p184) target = $region36
        $region35: #{tpu_custom_call.1} parent=31 // pred_region
          %s187 = sand.u32 %s27, 1
          %s188 = scalar_lea.sflag [#allocation3], %s187
          %s189 = sand.u32 %s27, 1
          %s190 = smul.addr %s189, 16
          %s191 = scalar_lea.vmem [#allocation2], %s190
          %s193 = ssub.s32 256, 256
          %194 = vsyncadd %s188, %s193
          %s195 = smul.addr %s17, 2
          %s196 = smul.addr %s195, 128
          %s197 = scalar_lea.hbm %s0, %s196
          %s199 = sshll.u32 %s191, 4
          %s200 = int_to_ptr.vmem [resolvable:$true] %s199
          %202 = dma.hbm_to_vmem [thread:$0]  %s197, 256, %s200, %s188
        $region36: #{tpu_custom_call.1} parent=31 // pred_fallthru
          _
      $region32: #{tpu_custom_call.1} parent=5 // pred_fallthru
        _
      %p203 = scmp.le.s32.totalorder 1, %s17
      %p204 = scmp.lt.s32.totalorder %s17, 3
      %p205 = pnand %p203, %p204
      %p206 = pneg %p205
      // Predicated region
      $region37: #{tpu_custom_call.1} parent=5 // pred_check
        _
      $region38: #{tpu_custom_call.1} parent=5 // pred_check_branch
        %208 = sbr.rel (%p205) target = $region40
      $region39: #{tpu_custom_call.1} parent=5 // pred_region
        %s209 = ssub.s32 %s17, 1
        %s210 = sand.u32 %s30, 1
        %s211 = scalar_lea.sflag [#allocation3], %s210
        %s212 = sand.u32 %s30, 1
        %s213 = smul.addr %s212, 16
        %s214 = scalar_lea.vmem [#allocation2], %s213
        // Predicated region
        $region41: #{tpu_custom_call.1} parent=39 // pred_check
          %p215 = pneg %p43
        $region42: #{tpu_custom_call.1} parent=39 // pred_check_branch
          %217 = sbr.rel (%p215) target = $region44
        $region43: #{tpu_custom_call.1} parent=39 // pred_region
          %218 = dma.done %s211, 256
        $region44: #{tpu_custom_call.1} parent=39 // pred_fallthru
          _
        %s219 = sand.u32 %s30, 1
        %s220 = scalar_lea.sflag [#allocation3], %s219
        %s221 = sand.u32 %s30, 1
        %s222 = smul.addr %s221, 16
        %s223 = scalar_lea.vmem [#allocation2], %s222
        %p224 = pneg %p43
        %p225 = pneg %p40
        %p226 = pneg %p64
        %p227 = pneg %p61
        %p228 = pneg %p85
        %p229 = pneg %p82
        %p230 = pneg %p106
        %p231 = pneg %p103
        %p232 = pneg %p127
        %p233 = pneg %p124
        %p234 = pneg %p153
        %p235 = pneg %p150
        %s236 = sand.u32 %s140, 1
        %s237 = scalar_lea.sflag [#allocation4], %s236
        %s238 = sand.u32 %s140, 1
        %s239 = smul.addr %s238, 16
        %s240 = scalar_lea.vmem [#allocation5], %s239
        %v241 = vld [vmem:[%s4] sm:$0xff]
        %v242 = vld [vmem:[%s4 + $0x8] sm:$0xff]
        %v243 = vld [vmem:[%s1] sm:$0xff]
        %v244 = vld [vmem:[%s3] sm:$0xff]
        %s245 = scalar_lea.vmem %s3, 8
        %v246 = vld [vmem:[%s245] sm:$0xff]
        %s247 = scalar_lea.vmem %s3, 16
        %v248 = vld [vmem:[%s247] sm:$0xff]
        %v249 = vld [vmem:[%s2] sm:$0xff]
        %v250 = vld [vmem:[%s214] sm:$0xff]
        %v251 = vld [vmem:[%s214 + $0x8] sm:$0xff]
        %vm252 = vcmp.lt.f32.partialorder %v241, 1.0
        %vm253 = vcmp.lt.f32.partialorder %v242, 1.0
        %254 = vrot.lane.b32.xlu0 %v250, 113
        %v255 = vpop.permute.xlu0 %254
        %256 = vrot.lane.b32.xlu0 %v251, 113
        %v257 = vpop.permute.xlu0 %256
        %v258 = vlaneseq
        %v259 = vand.u32 %v258, 127
        %vm260 = vcmp.lt.s32.totalorder %v259, 113
        %v261 = vsel %vm260, %v255, %v257
        %v262 = vsel %vm260, %v257, %v255
        %263 = vrot.lane.b32.xlu0 %v250, 1
        %v264 = vpop.permute.xlu0 %263
        %265 = vrot.lane.b32.xlu0 %v251, 1
        %v266 = vpop.permute.xlu0 %265
        %vm267 = vcmp.lt.s32.totalorder %v259, 1
        %v268 = vsel %vm267, %v264, %v266
        %v269 = vsel %vm267, %v266, %v264
        %v270 = vsel %vm252, 1, 0
        %v271 = vsel %vm253, 1, 0
        %v272 = vlaneseq
        %v273 = vshrl.u32 %v272, 7
        %v274 = vsub.s32 1, %v273
        %v275 = vrot.slane %v270, %v274
        %v276 = vlaneseq
        %v277 = vshrl.u32 %v276, 7
        %v278 = vsub.s32 1, %v277
        %v279 = vrot.slane %v271, %v278
        %vm280 = vcmp.eq.s32.totalorder %v275, 1
        %vm281 = vcmp.eq.s32.totalorder %v279, 1
        %v282 = vsel %vm280, %v261, %v269
        %v283 = vsel %vm281, %v262, %v268
        %vm284 = vcmp.ge.f32.partialorder %v241, 15.0
        %vm285 = vcmp.ge.f32.partialorder %v242, 15.0
        %286 = vrot.lane.b32.xlu0 %v250, 15
        %v287 = vpop.permute.xlu0 %286
        %288 = vrot.lane.b32.xlu0 %v251, 15
        %v289 = vpop.permute.xlu0 %288
        %vm290 = vcmp.lt.s32.totalorder %v259, 15
        %v291 = vsel %vm290, %v287, %v289
        %v292 = vsel %vm290, %v289, %v287
        %293 = vrot.lane.b32.xlu0 %v250, 127
        %v294 = vpop.permute.xlu0 %293
        %295 = vrot.lane.b32.xlu0 %v251, 127
        %v296 = vpop.permute.xlu0 %295
        %vm297 = vcmp.lt.s32.totalorder %v259, 127
        %v298 = vsel %vm297, %v294, %v296
        %v299 = vsel %vm297, %v296, %v294
        %v300 = vsel %vm284, 1, 0
        %v301 = vsel %vm285, 1, 0
        %v302 = vlaneseq
        %v303 = vshrl.u32 %v302, 7
        %v304 = vsub.s32 1, %v303
        %v305 = vrot.slane %v300, %v304
        %v306 = vlaneseq
        %v307 = vshrl.u32 %v306, 7
        %v308 = vsub.s32 1, %v307
        %v309 = vrot.slane %v301, %v308
        %vm310 = vcmp.eq.s32.totalorder %v305, 1
        %vm311 = vcmp.eq.s32.totalorder %v309, 1
        %v312 = vsel %vm310, %v292, %v298
        %v313 = vsel %vm311, %v291, %v299
        %314 = vrot.lane.b32.xlu0 %v282, 16
        %v315 = vpop.permute.xlu0 %314
        %316 = vrot.lane.b32.xlu0 %v283, 16
        %v317 = vpop.permute.xlu0 %316
        %vm318 = vcmp.lt.s32.totalorder %v259, 16
        %v319 = vsel %vm318, %v315, %v317
        %v320 = vsel %vm318, %v317, %v315
        %321 = vrot.lane.b32.xlu0 %v250, 16
        %v322 = vpop.permute.xlu0 %321
        %323 = vrot.lane.b32.xlu0 %v251, 16
        %v324 = vpop.permute.xlu0 %323
        %v325 = vsel %vm318, %v322, %v324
        %v326 = vsel %vm318, %v324, %v322
        %327 = vrot.lane.b32.xlu0 %v312, 16
        %v328 = vpop.permute.xlu0 %327
        %329 = vrot.lane.b32.xlu0 %v313, 16
        %v330 = vpop.permute.xlu0 %329
        %v331 = vsel %vm318, %v328, %v330
        %v332 = vsel %vm318, %v330, %v328
        %333 = vrot.lane.b32.xlu0 %v282, 112
        %v334 = vpop.permute.xlu0 %333
        %335 = vrot.lane.b32.xlu0 %v283, 112
        %v336 = vpop.permute.xlu0 %335
        %vm337 = vcmp.lt.s32.totalorder %v259, 112
        %v338 = vsel %vm337, %v334, %v336
        %v339 = vsel %vm337, %v336, %v334
        %340 = vrot.lane.b32.xlu0 %v250, 112
        %v341 = vpop.permute.xlu0 %340
        %342 = vrot.lane.b32.xlu0 %v251, 112
        %v343 = vpop.permute.xlu0 %342
        %v344 = vsel %vm337, %v341, %v343
        %v345 = vsel %vm337, %v343, %v341
        %346 = vrot.lane.b32.xlu0 %v312, 112
        %v347 = vpop.permute.xlu0 %346
        %348 = vrot.lane.b32.xlu0 %v313, 112
        %v349 = vpop.permute.xlu0 %348
        %v350 = vsel %vm337, %v347, %v349
        %v351 = vsel %vm337, %v349, %v347
        %353 = vset.pattern.permute.xlu0 0
        %354 = vperm.xlu0 %353, %v244
        %v355 = vpop.permute.xlu0 %354
        %vm357 = vcmask 588800
        %v359 = vsel %vm357, %v243, 0
        %361 = vmatprep.subr.mxu0 %v319
        %362 = vmatpush1.msra.mxu0 %v320
        %363 = vmatprep.subr.mxu0 %v325
        %364 = vmatpush1.msra.mxu0 %v326
        %365 = vmatprep.subr.mxu0 %v331
        %366 = vmatpush1.msra.mxu0 %v332
        %367 = vmatprep.subr.mxu0 %v283
        %368 = vmatpush1.msra.mxu0 %v282
        %369 = vmatprep.subr.mxu0 %v251
        %370 = vmatpush1.msra.mxu0 %v250
        %371 = vmatprep.subr.mxu0 %v313
        %372 = vmatpush1.msra.mxu0 %v312
        %373 = vmatprep.subr.mxu0 %v339
        %374 = vmatpush1.msra.mxu0 %v338
        %375 = vmatprep.subr.mxu0 %v345
        %376 = vmatpush1.msra.mxu0 %v344
        %377 = vmatprep.subr.mxu0 %v351
        %378 = vmatpush1.msra.mxu0 %v350
        %379 = vmatprep.subr.mxu0 0.0
        %380 = vmatpush1.msra.mxu0 0.0
        %381 = vmatprep.subr.mxu0 0.0
        %382 = vmatpush1.msra.mxu0 0.0
        %383 = vmatprep.subr.mxu0 0.0
        %384 = vmatpush1.msra.mxu0 0.0
        %385 = vmatprep.subr.mxu0 0.0
        %386 = vmatpush1.msra.mxu0 0.0
        %387 = vmatprep.subr.mxu0 0.0
        %388 = vmatpush1.msra.mxu0 0.0
        %389 = vmatprep.subr.mxu0 0.0
        %390 = vmatpush1.msra.mxu0 0.0
        %391 = vmatprep.subr.mxu0 0.0
        %392 = vmatpush1.msra.mxu0 0.0
        %393 = vmatprep.subr.mxu0 0.0
        %394 = vmatpush1.msra.mxu0 0.0
        %395 = vmatprep.subr.mxu0 0.0
        %396 = vmatpush1.msra.mxu0 0.0
        %397 = vmatprep.subr.mxu0 0.0
        %398 = vmatpush1.msra.mxu0 0.0
        %399 = vmatprep.subr.mxu0 0.0
        %400 = vmatpush1.msra.mxu0 0.0
        %401 = vmatprep.subr.mxu0 0.0
        %402 = vmatpush1.msra.mxu0 0.0
        %403 = vmatprep.subr.mxu0 0.0
        %404 = vmatpush1.msra.mxu0 0.0
        %405 = vmatprep.subr.mxu0 0.0
        %406 = vmatpush1.msra.mxu0 0.0
        %407 = vmatprep.subr.mxu0 0.0
        %408 = vmatpush1.msra.mxu0 0.0
        %409 = vmatprep.subr.mxu0 0.0
        %410 = vmatpush1.msra.mxu0 0.0
        %411 = vmatprep.subr.mxu0 0.0
        %412 = vmatpush1.msra.mxu0 0.0
        %413 = vmatprep.subr.mxu0 0.0
        %414 = vmatpush1.msra.mxu0 0.0
        %415 = vmatprep.subr.mxu0 0.0
        %416 = vmatpush1.msra.mxu0 0.0
        %417 = vmatprep.subr.mxu0 0.0
        %418 = vmatpush1.msra.mxu0 0.0
        %419 = vmatprep.subr.mxu0 0.0
        %420 = vmatpush1.msra.mxu0 0.0
        %421 = vmatprep.subr.mxu0 0.0
        %422 = vmatpush1.msra.mxu0 0.0
        %423 = vmatprep.subr.mxu0 0.0
        %424 = vmatpush1.msra.mxu0 0.0
        %425 = vmatprep.mubr.f32.mxu0 0.0
        %426 = vmatmul.mubr.f32.gmra.mrb[0].mxu0 %v359
        %v427 = vpop.f32.mrb[0].mxu0
        %v428 = vadd.f32 %v355, %v427
        %v429 = vpop.f32.mrb[0].mxu0
        %v430 = vadd.f32 %v355, %v429
        %431 = vdwg.mxu0
        %v432 = vadd.f32 %v428, %v430
        %433 = vadd.xlane.f32.xlu0 %v432
        %v434 = vpop.xlane.xlu0 %433
        %vm435 = vcmask 64512
        %v437 = vsel %vm435, %v249, 0
        %439 = vmatprep.subr.mxu0 0.0
        %440 = vmatpush1.msra.mxu0 %v434
        %441 = vmatprep.subr.mxu0 0.0
        %442 = vmatpush1.msra.mxu0 0.0
        %443 = vmatprep.subr.mxu0 0.0
        %444 = vmatpush1.msra.mxu0 0.0
        %445 = vmatprep.subr.mxu0 0.0
        %446 = vmatpush1.msra.mxu0 0.0
        %447 = vmatprep.subr.mxu0 0.0
        %448 = vmatpush1.msra.mxu0 0.0
        %449 = vmatprep.subr.mxu0 0.0
        %450 = vmatpush1.msra.mxu0 0.0
        %451 = vmatprep.subr.mxu0 0.0
        %452 = vmatpush1.msra.mxu0 0.0
        %453 = vmatprep.subr.mxu0 0.0
        %454 = vmatpush1.msra.mxu0 0.0
        %455 = vmatprep.subr.mxu0 0.0
        %456 = vmatpush1.msra.mxu0 0.0
        %457 = vmatprep.subr.mxu0 0.0
        %458 = vmatpush1.msra.mxu0 0.0
        %459 = vmatprep.subr.mxu0 0.0
        %460 = vmatpush1.msra.mxu0 0.0
        %461 = vmatprep.subr.mxu0 0.0
        %462 = vmatpush1.msra.mxu0 0.0
        %463 = vmatprep.subr.mxu0 0.0
        %464 = vmatpush1.msra.mxu0 0.0
        %465 = vmatprep.subr.mxu0 0.0
        %466 = vmatpush1.msra.mxu0 0.0
        %467 = vmatprep.subr.mxu0 0.0
        %468 = vmatpush1.msra.mxu0 0.0
        %469 = vmatprep.subr.mxu0 0.0
        %470 = vmatpush1.msra.mxu0 0.0
        %471 = vmatprep.subr.mxu0 0.0
        %472 = vmatpush1.msra.mxu0 0.0
        %473 = vmatprep.subr.mxu0 0.0
        %474 = vmatpush1.msra.mxu0 0.0
        %475 = vmatprep.subr.mxu0 0.0
        %476 = vmatpush1.msra.mxu0 0.0
        %477 = vmatprep.subr.mxu0 0.0
        %478 = vmatpush1.msra.mxu0 0.0
        %479 = vmatprep.subr.mxu0 0.0
        %480 = vmatpush1.msra.mxu0 0.0
        %481 = vmatprep.subr.mxu0 0.0
        %482 = vmatpush1.msra.mxu0 0.0
        %483 = vmatprep.subr.mxu0 0.0
        %484 = vmatpush1.msra.mxu0 0.0
        %485 = vmatprep.subr.mxu0 0.0
        %486 = vmatpush1.msra.mxu0 0.0
        %487 = vmatprep.subr.mxu0 0.0
        %488 = vmatpush1.msra.mxu0 0.0
        %489 = vmatprep.subr.mxu0 0.0
        %490 = vmatpush1.msra.mxu0 0.0
        %491 = vmatprep.subr.mxu0 0.0
        %492 = vmatpush1.msra.mxu0 0.0
        %493 = vmatprep.subr.mxu0 0.0
        %494 = vmatpush1.msra.mxu0 0.0
        %495 = vmatprep.subr.mxu0 0.0
        %496 = vmatpush1.msra.mxu0 0.0
        %497 = vmatprep.subr.mxu0 0.0
        %498 = vmatpush1.msra.mxu0 0.0
        %499 = vmatprep.subr.mxu0 0.0
        %500 = vmatpush1.msra.mxu0 0.0
        %501 = vmatprep.subr.mxu0 0.0
        %502 = vmatpush1.msra.mxu0 0.0
        %503 = vmatprep.mubr.f32.mxu0 0.0
        %504 = vmatmul.mubr.f32.gmra.mrb[0].mxu0 %v437
        %v505 = vpop.f32.mrb[0].mxu0
        %v506 = vadd.f32 0.0, %v505
        %v507 = vpop.f32.mrb[0].mxu0
        %508 = vdwg.mxu0
        %v509 = vmul.f32 %v506, 0.001953125
        %511 = vset.pattern.permute.xlu0 0
        %512 = vperm.xlu0 %511, %v509
        %v513 = vpop.permute.xlu0 %512
        %v515 = vsub.f32 %v428, %v513
        %v516 = vsub.f32 %v430, %v513
        %v517 = vmul.f32 %v515, %v515
        %v518 = vmul.f32 %v516, %v516
        %v519 = vadd.f32 %v517, %v518
        %520 = vadd.xlane.f32.xlu0 %v519
        %v521 = vpop.xlane.xlu0 %520
        %522 = vmatprep.subr.mxu0 0.0
        %523 = vmatpush1.msra.mxu0 %v521
        %524 = vmatprep.subr.mxu0 0.0
        %525 = vmatpush1.msra.mxu0 0.0
        %526 = vmatprep.subr.mxu0 0.0
        %527 = vmatpush1.msra.mxu0 0.0
        %528 = vmatprep.subr.mxu0 0.0
        %529 = vmatpush1.msra.mxu0 0.0
        %530 = vmatprep.subr.mxu0 0.0
        %531 = vmatpush1.msra.mxu0 0.0
        %532 = vmatprep.subr.mxu0 0.0
        %533 = vmatpush1.msra.mxu0 0.0
        %534 = vmatprep.subr.mxu0 0.0
        %535 = vmatpush1.msra.mxu0 0.0
        %536 = vmatprep.subr.mxu0 0.0
        %537 = vmatpush1.msra.mxu0 0.0
        %538 = vmatprep.subr.mxu0 0.0
        %539 = vmatpush1.msra.mxu0 0.0
        %540 = vmatprep.subr.mxu0 0.0
        %541 = vmatpush1.msra.mxu0 0.0
        %542 = vmatprep.subr.mxu0 0.0
        %543 = vmatpush1.msra.mxu0 0.0
        %544 = vmatprep.subr.mxu0 0.0
        %545 = vmatpush1.msra.mxu0 0.0
        %546 = vmatprep.subr.mxu0 0.0
        %547 = vmatpush1.msra.mxu0 0.0
        %548 = vmatprep.subr.mxu0 0.0
        %549 = vmatpush1.msra.mxu0 0.0
        %550 = vmatprep.subr.mxu0 0.0
        %551 = vmatpush1.msra.mxu0 0.0
        %552 = vmatprep.subr.mxu0 0.0
        %553 = vmatpush1.msra.mxu0 0.0
        %554 = vmatprep.subr.mxu0 0.0
        %555 = vmatpush1.msra.mxu0 0.0
        %556 = vmatprep.subr.mxu0 0.0
        %557 = vmatpush1.msra.mxu0 0.0
        %558 = vmatprep.subr.mxu0 0.0
        %559 = vmatpush1.msra.mxu0 0.0
        %560 = vmatprep.subr.mxu0 0.0
        %561 = vmatpush1.msra.mxu0 0.0
        %562 = vmatprep.subr.mxu0 0.0
        %563 = vmatpush1.msra.mxu0 0.0
        %564 = vmatprep.subr.mxu0 0.0
        %565 = vmatpush1.msra.mxu0 0.0
        %566 = vmatprep.subr.mxu0 0.0
        %567 = vmatpush1.msra.mxu0 0.0
        %568 = vmatprep.subr.mxu0 0.0
        %569 = vmatpush1.msra.mxu0 0.0
        %570 = vmatprep.subr.mxu0 0.0
        %571 = vmatpush1.msra.mxu0 0.0
        %572 = vmatprep.subr.mxu0 0.0
        %573 = vmatpush1.msra.mxu0 0.0
        %574 = vmatprep.subr.mxu0 0.0
        %575 = vmatpush1.msra.mxu0 0.0
        %576 = vmatprep.subr.mxu0 0.0
        %577 = vmatpush1.msra.mxu0 0.0
        %578 = vmatprep.subr.mxu0 0.0
        %579 = vmatpush1.msra.mxu0 0.0
        %580 = vmatprep.subr.mxu0 0.0
        %581 = vmatpush1.msra.mxu0 0.0
        %582 = vmatprep.subr.mxu0 0.0
        %583 = vmatpush1.msra.mxu0 0.0
        %584 = vmatprep.subr.mxu0 0.0
        %585 = vmatpush1.msra.mxu0 0.0
        %586 = vmatprep.mubr.f32.mxu0 0.0
        %587 = vmatmul.mubr.f32.gmra.mrb[0].mxu0 %v437
        %v588 = vpop.f32.mrb[0].mxu0
        %v589 = vadd.f32 0.0, %v588
        %v590 = vpop.f32.mrb[0].mxu0
        %591 = vdwg.mxu0
        %v592 = vmul.f32 %v589, 0.001953125
        %v593 = vadd.f32 %v592, 1e-05
        %v594 = vrsqrt.pop %v593
        %v595 = vmul.f32 %v594, %v246
        %597 = vset.pattern.permute.xlu0 0
        %598 = vperm.xlu0 %597, %v595
        %v599 = vpop.permute.xlu0 %598
        %v601 = vmul.f32 %v515, %v599
        %v602 = vmul.f32 %v516, %v599
        %604 = vset.pattern.permute.xlu0 0
        %605 = vperm.xlu0 %604, %v248
        %v606 = vpop.permute.xlu0 %605
        %v608 = vadd.f32 %v601, %v606
        %v609 = vadd.f32 %v602, %v606
        %610 = vst [vmem:[%s240] sm:$0xff] %v608
        %611 = vst [vmem:[%s240 + $0x8] sm:$0xff] %v609
        %s612 = sand.u32 %s140, 1
        %s613 = scalar_lea.sflag [#allocation4], %s612
        %s614 = sand.u32 %s140, 1
        %s615 = smul.addr %s614, 16
        %s616 = scalar_lea.vmem [#allocation5], %s615
        // Predicated region
        $region45: #{tpu_custom_call.1} parent=39 // pred_check
          %p617 = pneg %p150
        $region46: #{tpu_custom_call.1} parent=39 // pred_check_branch
          %619 = sbr.rel (%p617) target = $region48
        $region47: #{tpu_custom_call.1} parent=39 // pred_region
          %s621 = ssub.s32 256, 256
          %622 = vsyncadd %s613, %s621
          %s623 = smul.addr %s22, 2
          %s624 = smul.addr %s623, 128
          %s625 = scalar_lea.hbm %s5, %s624
          %s627 = sshll.u32 %s616, 4
          %s628 = int_to_ptr.vmem [resolvable:$true] %s627
          %630 = dma.vmem_to_hbm [thread:$0]  %s628, 256, %s625, %s613
        $region48: #{tpu_custom_call.1} parent=39 // pred_fallthru
          _
      $region40: #{tpu_custom_call.1} parent=5 // pred_fallthru
        _
      %p631 = scmp.le.s32.totalorder 2, %s17
      // Predicated region
      $region49: #{tpu_custom_call.1} parent=5 // pred_check
        %p632 = pneg %p631
      $region50: #{tpu_custom_call.1} parent=5 // pred_check_branch
        %634 = sbr.rel (%p632) target = $region52
      $region51: #{tpu_custom_call.1} parent=5 // pred_region
        %s635 = ssub.s32 %s17, 2
        // Predicated region
        $region53: #{tpu_custom_call.1} parent=51 // pred_check
          %p636 = pneg %p156
        $region54: #{tpu_custom_call.1} parent=51 // pred_check_branch
          %638 = sbr.rel (%p636) target = $region56
        $region55: #{tpu_custom_call.1} parent=51 // pred_region
          %s639 = sand.u32 %s141, 1
          %s640 = scalar_lea.sflag [#allocation4], %s639
          %s641 = sand.u32 %s141, 1
          %s642 = smul.addr %s641, 16
          %s643 = scalar_lea.vmem [#allocation5], %s642
          %644 = dma.done %s640, 256
        $region56: #{tpu_custom_call.1} parent=51 // pred_fallthru
          _
      $region52: #{tpu_custom_call.1} parent=5 // pred_fallthru
        _
    $region6: #{tpu_custom_call.1} parent=1 // loop_footer
      %s21 = sadd.s32 1, %s17
    $region7: #{tpu_custom_call.1} parent=1 // loop_footer_branch
      %16 = sbr.rel target = $region3
    $region8: #{tpu_custom_call.1} parent=1 // loop_exit
      _
    %645 = vsyncpa [#allocation3], 1
    %s646 = scalar_lea.sflag [#allocation3], 1
    %647 = vsyncpa %s646, 1
    %648 = vsyncpa [#allocation4], 1
    %s649 = scalar_lea.sflag [#allocation4], 1
    %650 = vsyncpa %s649, 1

</llo_original>
